<compile_context>
chip_gen: v7x
topology: tpu7x:2x2x1
jax: 0.10.0
libtpu: 0.0.40
codegen_flags: <defaults>
</compile_context>

<pallas_src>
import jax
import jax.numpy as jnp
from jax.experimental import pallas as pl
from jax.experimental.pallas import tpu as pltpu


def _action_gen_kernel(h_ref, w1t_ref, b1_ref, w2p_ref, b2p_ref, out_ref):
    # fc + ReLU, transposed so the batch is the lane axis.
    #   w1t: (HID, IN), h: (Bt, IN)  --contract IN--> feat_T: (HID, Bt)
    feat_t = jax.lax.dot_general(
        w1t_ref[...], h_ref[...].astype(w1t_ref.dtype),
        dimension_numbers=(((1,), (1,)), ((), ())),
        preferred_element_type=jnp.float32)
    feat_t = jnp.maximum(feat_t + b1_ref[...].astype(jnp.float32), 0.0)

    # fc_logprob1 (padded to A+2 rows): logits_T: (A+2, Bt), lane-dense.
    logits_t = jnp.dot(w2p_ref[...], feat_t.astype(w2p_ref.dtype),
                       preferred_element_type=jnp.float32)
    logits_t = logits_t + b2p_ref[...].astype(jnp.float32)

    AP, Bt = logits_t.shape           # AP = A + 2 (last 2 rows are ~-FLT_MAX pads)
    A = AP - 2

    # log_softmax over the action (sublane) axis; pad rows contribute exp()==0.
    m = jnp.max(logits_t, axis=0, keepdims=True)          # (1, Bt)
    z = logits_t - m
    lse = jnp.log(jnp.sum(jnp.exp(z), axis=0, keepdims=True))
    logp_t = z - lse                                       # (AP, Bt)

    # argmax over the action axis (first occurrence on ties) via iota + min.
    row = jax.lax.broadcasted_iota(jnp.int32, (AP, Bt), 0)
    sel = jnp.min(jnp.where(logits_t == m, row, AP), axis=0, keepdims=True)
    clp = -lse                                             # logp at argmax, exactly

    # One dense (AP, Bt) store: rows [0, A) = log-probs, row A = argmax,
    # row A+1 = classifier_log_prob.  Pure elementwise merge, no concat.
    tile = jnp.where(row < A, logp_t,
                     jnp.where(row == A, sel.astype(jnp.float32), clp))
    out_ref[...] = tile


def _pick_block_b(B, tile=512):
    """Row tile over the batch (the lane axis of every in-kernel tensor).

    Tiles must be a multiple of 128 lanes or cover the whole batch; 512-row
    tiles measured ~85% of HBM roofline.  For B > tile the grid has >= 2
    steps, so "parallel" dimension_semantics shards rows across both
    TensorCores on v7x.  The ragged trailing tile of the cdiv grid is safe:
    rows are independent, padded rows are recomputed/discarded.
    """
    return B if B <= tile else tile


def action_generator_forward(h_t, w1, b1, w2, b2):
    """h_t: (B, in). w1: (in, hid). b1: (hid,). w2: (hid, A). b2: (A,)."""
    B, IN = h_t.shape
    HID = w1.shape[1]
    A = w2.shape[1]
    AP = A + 2

    block_b = _pick_block_b(B)
    grid = (pl.cdiv(B, block_b),)

    # One-time (tiny) parameter reshuffles done outside the kernel:
    #   * w1, w2 transposed so both matmuls are lane-dense in the batch.
    #   * w2/b2 padded with 2 dummy action rows (zero weights, ~-FLT_MAX bias)
    #     so the kernel's packed (A+2, Bt) tile needs no in-kernel concat.
    neg = jnp.finfo(jnp.float32).min
    w1_t = w1.T                                                    # (HID, IN)
    b1_col = b1.reshape(HID, 1)
    w2_p = jnp.concatenate([w2.T, jnp.zeros((2, HID), w2.dtype)], axis=0)  # (A+2, HID)
    b2_p = jnp.concatenate(
        [b2.astype(jnp.float32), jnp.full((2,), neg, jnp.float32)]
    ).reshape(AP, 1)

    cost = pl.CostEstimate(
        flops=2 * B * (IN * HID + HID * AP),
        transcendentals=B * (AP + 1),                  # exp per (padded) logit + log
        bytes_accessed=(h_t.size * h_t.dtype.itemsize
                        + w1.size * w1.dtype.itemsize
                        + w2.size * w2.dtype.itemsize
                        + (HID + AP) * 4
                        + B * AP * 4),
    )

    packed = pl.pallas_call(
        _action_gen_kernel,
        out_shape=jax.ShapeDtypeStruct((AP, B), jnp.float32),
        grid=grid,
        in_specs=[
            pl.BlockSpec((block_b, IN), lambda i: (i, 0)),   # h rows tile over grid
            pl.BlockSpec((HID, IN), lambda i: (0, 0)),       # weights stay resident
            pl.BlockSpec((HID, 1), lambda i: (0, 0)),
            pl.BlockSpec((AP, HID), lambda i: (0, 0)),
            pl.BlockSpec((AP, 1), lambda i: (0, 0)),
        ],
        out_specs=pl.BlockSpec((AP, block_b), lambda i: (0, i)),   # lane-dense slab
        compiler_params=pltpu.CompilerParams(
            dimension_semantics=("parallel",)),                    # megacore on v7x
        cost_estimate=cost,
    )(h_t, w1_t, b1_col, w2_p, b2_p)

    logp = packed[:A, :].T                       # (B, A)
    sel = packed[A, :].astype(jnp.int32)         # (B,)  exact: A << 2^24
    clp = packed[A + 1, :]                       # (B,)

    return {
        "selected_classifier": sel,
        "classifier_log_prob": clp,      # already squeezed to (B,)
        "actions_log_prob": logp,
    }


def _reference(h_t, w1, b1, w2, b2):
    feat = jnp.maximum(h_t @ w1 + b1, 0.0)
    logits = feat @ w2 + b2
    logp = jax.nn.log_softmax(logits, axis=1)
    sel = jnp.argmax(logits, axis=1).astype(jnp.int32)
    clp = jnp.take_along_axis(logp, sel[:, None], axis=1)[:, 0]
    return {"selected_classifier": sel,
            "classifier_log_prob": clp,
            "actions_log_prob": logp}


if __name__ == "__main__":
    # Small shapes implied by the module:
    #   input_size=32, config.action_net_hidden_size=32, action_prob_size=8
    B, IN, HID, ACT = 8, 32, 32, 8

    key = jax.random.PRNGKey(0)
    k_h, k_w1, k_b1, k_w2, k_b2 = jax.random.split(key, 5)

    h_t = jax.random.normal(k_h, (B, IN), dtype=jnp.float32)
    # Deterministic parameter init (synthetic; shapes match the nn.Linear
    # layers, stored transposed to (in, out)).
    w1 = jax.random.normal(k_w1, (IN, HID), dtype=jnp.float32) * (1.0 / IN) ** 0.5
    b1 = jax.random.normal(k_b1, (HID,), dtype=jnp.float32) * 0.01
    w2 = jax.random.normal(k_w2, (HID, ACT), dtype=jnp.float32) * (1.0 / HID) ** 0.5
    b2 = jax.random.normal(k_b2, (ACT,), dtype=jnp.float32) * 0.01

    out = action_generator_forward(h_t, w1, b1, w2, b2)
    jax.block_until_ready(out)

    ref = _reference(h_t, w1, b1, w2, b2)
    assert jnp.allclose(out["actions_log_prob"], ref["actions_log_prob"],
                        atol=1e-5, rtol=1e-5)
    assert jnp.array_equal(out["selected_classifier"], ref["selected_classifier"])
    assert jnp.allclose(out["classifier_log_prob"], ref["classifier_log_prob"],
                        atol=1e-5, rtol=1e-5)

    print("KERNEL_OK")
</pallas_src>

<mosaic_0001>
module attributes {stable_mosaic.version = 11 : i64} {
  func.func @_action_gen_kernel(%arg0: i32, %arg1: memref<8x32xf32, #tpu.memory_space<vmem>>, %arg2: memref<32x32xf32, #tpu.memory_space<vmem>>, %arg3: memref<32x1xf32, #tpu.memory_space<vmem>>, %arg4: memref<10x32xf32, #tpu.memory_space<vmem>>, %arg5: memref<10x1xf32, #tpu.memory_space<vmem>>, %arg6: memref<10x8xf32, #tpu.memory_space<vmem>>) attributes {dimension_semantics = [#tpu.dimension_semantics<parallel>], iteration_bounds = array<i64: 1>, scalar_prefetch = 0 : i64, scratch_operands = 0 : i64, tpu.core_type = #tpu.core_type<tc>, window_params = [{transform_indices = @transform_0, window_bounds = array<i64: 8, 32>}, {pipeline_mode = #tpu.pipeline_mode<synchronous>, transform_indices = @transform_1, window_bounds = array<i64: 32, 32>}, {pipeline_mode = #tpu.pipeline_mode<synchronous>, transform_indices = @transform_2, window_bounds = array<i64: 32, 1>}, {pipeline_mode = #tpu.pipeline_mode<synchronous>, transform_indices = @transform_3, window_bounds = array<i64: 10, 32>}, {pipeline_mode = #tpu.pipeline_mode<synchronous>, transform_indices = @transform_4, window_bounds = array<i64: 10, 1>}, {transform_indices = @transform_5, window_bounds = array<i64: 10, 8>}]} {
    %c0 = arith.constant 0 : index
    %c0_0 = arith.constant 0 : index
    %0 = vector.load %arg2[%c0, %c0_0] : memref<32x32xf32, #tpu.memory_space<vmem>>, vector<32x32xf32>
    %c0_1 = arith.constant 0 : index
    %c0_2 = arith.constant 0 : index
    %1 = vector.load %arg1[%c0_1, %c0_2] : memref<8x32xf32, #tpu.memory_space<vmem>>, vector<8x32xf32>
    %cst = arith.constant dense<0.000000e+00> : vector<32x8xf32>
    %2 = tpu.matmul %0, %1, %cst {dimension_numbers = #tpu.dot_dimension_numbers<[1], [1], [0], [0], [0, 0, 1, 0], [], []>} : vector<32x32xf32>, vector<8x32xf32>, vector<32x8xf32> -> vector<32x8xf32>
    %c0_3 = arith.constant 0 : index
    %c0_4 = arith.constant 0 : index
    %3 = vector.load %arg3[%c0_3, %c0_4] : memref<32x1xf32, #tpu.memory_space<vmem>>, vector<32x1xf32>
    %4 = vector.broadcast %3 : vector<32x1xf32> to vector<32x8xf32>
    %5 = arith.addf %2, %4 : vector<32x8xf32>
    %cst_5 = arith.constant 0.000000e+00 : f32
    %6 = vector.broadcast %cst_5 : f32 to vector<32x8xf32>
    %7 = arith.maximumf %5, %6 : vector<32x8xf32>
    %c0_6 = arith.constant 0 : index
    %c0_7 = arith.constant 0 : index
    %8 = vector.load %arg4[%c0_6, %c0_7] : memref<10x32xf32, #tpu.memory_space<vmem>>, vector<10x32xf32>
    %cst_8 = arith.constant dense<0.000000e+00> : vector<10x8xf32>
    %9 = tpu.matmul %8, %7, %cst_8 {dimension_numbers = #tpu.dot_dimension_numbers<[1], [0], [0], [1], [0, 0, 1, 1], [], []>} : vector<10x32xf32>, vector<32x8xf32>, vector<10x8xf32> -> vector<10x8xf32>
    %c0_9 = arith.constant 0 : index
    %c0_10 = arith.constant 0 : index
    %10 = vector.load %arg5[%c0_9, %c0_10] : memref<10x1xf32, #tpu.memory_space<vmem>>, vector<10x1xf32>
    %11 = vector.broadcast %10 : vector<10x1xf32> to vector<10x8xf32>
    %12 = arith.addf %9, %11 : vector<10x8xf32>
    %cst_11 = arith.constant dense<0xFF800000> : vector<8xf32>
    %13 = vector.multi_reduction <maximumf>, %12, %cst_11 [0] : vector<10x8xf32> to vector<8xf32>
    %14 = vector.shape_cast %13 : vector<8xf32> to vector<1x8xf32>
    %15 = vector.broadcast %14 : vector<1x8xf32> to vector<10x8xf32>
    %16 = arith.subf %12, %15 : vector<10x8xf32>
    %17 = math.exp %16 : vector<10x8xf32>
    %cst_12 = arith.constant dense<0.000000e+00> : vector<8xf32>
    %18 = vector.multi_reduction <add>, %17, %cst_12 [0] : vector<10x8xf32> to vector<8xf32>
    %19 = vector.shape_cast %18 : vector<8xf32> to vector<1x8xf32>
    %20 = math.log %19 : vector<1x8xf32>
    %21 = vector.broadcast %20 : vector<1x8xf32> to vector<10x8xf32>
    %22 = arith.subf %16, %21 : vector<10x8xf32>
    %23 = tpu.iota {dimensions = array<i32: 0>} : vector<10x8xi32>
    %24 = vector.broadcast %14 : vector<1x8xf32> to vector<10x8xf32>
    %25 = arith.cmpf oeq, %12, %24 : vector<10x8xf32>
    %c10_i32 = arith.constant 10 : i32
    %26 = vector.broadcast %c10_i32 : i32 to vector<10x8xi32>
    %27 = arith.select %25, %23, %26 : vector<10x8xi1>, vector<10x8xi32>
    %cst_13 = arith.constant dense<2147483647> : vector<8xi32>
    %28 = vector.multi_reduction <minsi>, %27, %cst_13 [0] : vector<10x8xi32> to vector<8xi32>
    %29 = vector.shape_cast %28 : vector<8xi32> to vector<1x8xi32>
    %cst_14 = arith.constant 0.000000e+00 : f32
    %30 = vector.broadcast %cst_14 : f32 to vector<1x8xf32>
    %31 = arith.subf %30, %20 : vector<1x8xf32>
    %c8_i32 = arith.constant 8 : i32
    %32 = vector.broadcast %c8_i32 : i32 to vector<10x8xi32>
    %33 = arith.cmpi slt, %23, %32 : vector<10x8xi32>
    %c8_i32_15 = arith.constant 8 : i32
    %34 = vector.broadcast %c8_i32_15 : i32 to vector<10x8xi32>
    %35 = arith.cmpi eq, %23, %34 : vector<10x8xi32>
    %36 = arith.sitofp %29 : vector<1x8xi32> to vector<1x8xf32>
    %37 = vector.shape_cast %36 : vector<1x8xf32> to vector<1x8xf32>
    %38 = vector.broadcast %37 : vector<1x8xf32> to vector<10x8xf32>
    %39 = vector.shape_cast %31 : vector<1x8xf32> to vector<1x8xf32>
    %40 = vector.broadcast %39 : vector<1x8xf32> to vector<10x8xf32>
    %41 = arith.select %35, %38, %40 : vector<10x8xi1>, vector<10x8xf32>
    %42 = arith.select %33, %22, %41 : vector<10x8xi1>, vector<10x8xf32>
    %c0_16 = arith.constant 0 : index
    %c0_17 = arith.constant 0 : index
    %43 = vector.load %arg6[%c0_16, %c0_17] : memref<10x8xf32, #tpu.memory_space<vmem>>, vector<10x8xf32>
    tpu.vector_store %arg6[%c0_16, %c0_17], %42 {strides = array<i32>} : memref<10x8xf32, #tpu.memory_space<vmem>>, vector<10x8xf32>,
    return
  }
  func.func @transform_0(%arg0: i32) -> (i32, i32) {
    %c0_i32 = arith.constant 0 : i32
    %c0_i32_0 = arith.constant 0 : i32
    return %arg0, %c0_i32 : i32, i32
  }
  func.func @transform_1(%arg0: i32) -> (i32, i32) {
    %c0_i32 = arith.constant 0 : i32
    %c0_i32_0 = arith.constant 0 : i32
    %c0_i32_1 = arith.constant 0 : i32
    return %c0_i32, %c0_i32_0 : i32, i32
  }
  func.func @transform_2(%arg0: i32) -> (i32, i32) {
    %c0_i32 = arith.constant 0 : i32
    %c0_i32_0 = arith.constant 0 : i32
    %c0_i32_1 = arith.constant 0 : i32
    return %c0_i32, %c0_i32_0 : i32, i32
  }
  func.func @transform_3(%arg0: i32) -> (i32, i32) {
    %c0_i32 = arith.constant 0 : i32
    %c0_i32_0 = arith.constant 0 : i32
    %c0_i32_1 = arith.constant 0 : i32
    return %c0_i32, %c0_i32_0 : i32, i32
  }
  func.func @transform_4(%arg0: i32) -> (i32, i32) {
    %c0_i32 = arith.constant 0 : i32
    %c0_i32_0 = arith.constant 0 : i32
    %c0_i32_1 = arith.constant 0 : i32
    return %c0_i32, %c0_i32_0 : i32, i32
  }
  func.func @transform_5(%arg0: i32) -> (i32, i32) {
    %c0_i32 = arith.constant 0 : i32
    %c0_i32_0 = arith.constant 0 : i32
    return %c0_i32, %arg0 : i32, i32
  }
}

</mosaic_0001>

<llo_original>
// kernel: tpu_custom_call.1
$region0: #{tpu_custom_call.1}
  #allocation0 [shape = 'u32[]', space=smem, size = 0x4, offset = 0x4, fixed_abs, tag = 'smem constant byte address 0x4 - core index']
  #allocation1 [shape = 'u32[144,128]{1,0:T(1,128)}', space=vmem, size = 0x12000, scoped, tag = 'internal scratch']
  %s0 = inlined_call_operand.hbm [shape: f32[8,32], index: 0, kind: input, shape index: {}]
  %s1 = inlined_call_operand.vmem [shape: f32[32,32], index: 1, kind: input, shape index: {}]
  %s2 = inlined_call_operand.vmem [shape: f32[32,1], index: 2, kind: input, shape index: {}]
  %s3 = inlined_call_operand.vmem [shape: f32[10,32], index: 3, kind: input, shape index: {}]
  %s4 = inlined_call_operand.vmem [shape: f32[10,1], index: 4, kind: input, shape index: {}]
  %s5 = inlined_call_operand.vmem [shape: f32[10,8], index: 5, kind: output, shape index: {}]
  %s6 = sld [smem:[#allocation0]]
  $region34: #{tpu_custom_call.1} parent=0
    _
  %s8 = ssub.s32 1, %s6
  %s9 = scalar_select 0, %s8, %s6
  $region1: #{tpu_custom_call.1} parent=0
    #allocation2 [shape = 'u8[4096]{0}', space=vmem, size = 0x1000, scoped, tag = 'input window, operand 0, single buffered']
    #allocation3 [shape = 's32[1]{0}', space=sflag, size = 0x4, scoped, tag = 'scoped memory for tpu_custom_call.1']
    %10 = vsyncpa [#allocation3], 0
    // Predicated region
    $region2: #{tpu_custom_call.1} parent=1 // pred_check
      _
    $region3: #{tpu_custom_call.1} parent=1 // pred_check_branch
      %12 = sbr.rel (0) target = $region5
    $region4: #{tpu_custom_call.1} parent=1 // pred_region
      %s14 = ssub.s32 128, 128
      %15 = vsyncadd [#allocation3], %s14
      %s17 = sshll.u32 [#allocation2], 4
      %s18 = int_to_ptr.vmem [resolvable:$true] %s17
      %20 = dma.hbm_to_vmem [thread:$0]  %s0, 128, %s18, [#allocation3]
    $region5: #{tpu_custom_call.1} parent=1 // pred_fallthru
      _
    // Predicated region
    $region6: #{tpu_custom_call.1} parent=1 // pred_check
      _
    $region7: #{tpu_custom_call.1} parent=1 // pred_check_branch
      %22 = sbr.rel (0) target = $region9
    $region8: #{tpu_custom_call.1} parent=1 // pred_region
      _
    $region9: #{tpu_custom_call.1} parent=1 // pred_fallthru
      _
    // Predicated region
    $region10: #{tpu_custom_call.1} parent=1 // pred_check
      _
    $region11: #{tpu_custom_call.1} parent=1 // pred_check_branch
      %24 = sbr.rel (0) target = $region13
    $region12: #{tpu_custom_call.1} parent=1 // pred_region
      _
    $region13: #{tpu_custom_call.1} parent=1 // pred_fallthru
      _
    // Predicated region
    $region14: #{tpu_custom_call.1} parent=1 // pred_check
      _
    $region15: #{tpu_custom_call.1} parent=1 // pred_check_branch
      %26 = sbr.rel (0) target = $region17
    $region16: #{tpu_custom_call.1} parent=1 // pred_region
      _
    $region17: #{tpu_custom_call.1} parent=1 // pred_fallthru
      _
    // Predicated region
    $region18: #{tpu_custom_call.1} parent=1 // pred_check
      _
    $region19: #{tpu_custom_call.1} parent=1 // pred_check_branch
      %28 = sbr.rel (0) target = $region21
    $region20: #{tpu_custom_call.1} parent=1 // pred_region
      _
    $region21: #{tpu_custom_call.1} parent=1 // pred_fallthru
      _
    // Predicated region
    $region22: #{tpu_custom_call.1} parent=1 // pred_check
      _
    $region23: #{tpu_custom_call.1} parent=1 // pred_check_branch
      %30 = sbr.rel (0) target = $region25
    $region24: #{tpu_custom_call.1} parent=1 // pred_region
      %31 = dma.done [#allocation3], 128
    $region25: #{tpu_custom_call.1} parent=1 // pred_fallthru
      _
    %v32 = vld [vmem:[%s1] sm:$0xff]
    %v33 = vld [vmem:[%s1 + $0x8] sm:$0xff]
    %v34 = vld [vmem:[%s1 + $0x10] sm:$0xff]
    %v35 = vld [vmem:[%s1 + $0x18] sm:$0xff]
    %v36 = vld [vmem:[#allocation2] sm:$0xff]
    %v37 = vld [vmem:[%s2] sm:$0xff]
    %v38 = vld [vmem:[%s2 + $0x8] sm:$0xff]
    %v39 = vld [vmem:[%s2 + $0x10] sm:$0xff]
    %v40 = vld [vmem:[%s2 + $0x18] sm:$0xff]
    %42 = vset.pattern.permute.xlu0 0
    %43 = vperm.xlu0 %42, %v37
    %v44 = vpop.permute.xlu0 %43
    %47 = vset.pattern.permute.xlu0 0
    %48 = vperm.xlu0 %47, %v38
    %v49 = vpop.permute.xlu0 %48
    %52 = vset.pattern.permute.xlu0 0
    %53 = vperm.xlu0 %52, %v39
    %v54 = vpop.permute.xlu0 %53
    %57 = vset.pattern.permute.xlu0 0
    %58 = vperm.xlu0 %57, %v40
    %v59 = vpop.permute.xlu0 %58
    %vm61 = vcmask 261120
    %v63 = vsel %vm61, %v32, 0
    %v66 = vsel %vm61, %v33, 0
    %v69 = vsel %vm61, %v34, 0
    %v72 = vsel %vm61, %v35, 0
    %v75 = vsel %vm61, %v36, 0
    %77 = vmatprep.subr.mxu0 0.0
    %78 = vmatpush1.xpose.msra.mxu0 %v75
    %79 = vmatprep.subr.mxu0 0.0
    %80 = vmatpush1.xpose.msra.mxu0 0.0
    %81 = vmatprep.subr.mxu0 0.0
    %82 = vmatpush1.xpose.msra.mxu0 0.0
    %83 = vmatprep.subr.mxu0 0.0
    %84 = vmatpush1.xpose.msra.mxu0 0.0
    %85 = vmatprep.subr.mxu0 0.0
    %86 = vmatpush1.xpose.msra.mxu0 0.0
    %87 = vmatprep.subr.mxu0 0.0
    %88 = vmatpush1.xpose.msra.mxu0 0.0
    %89 = vmatprep.subr.mxu0 0.0
    %90 = vmatpush1.xpose.msra.mxu0 0.0
    %91 = vmatprep.subr.mxu0 0.0
    %92 = vmatpush1.xpose.msra.mxu0 0.0
    %93 = vmatprep.subr.mxu0 0.0
    %94 = vmatpush1.xpose.msra.mxu0 0.0
    %95 = vmatprep.subr.mxu0 0.0
    %96 = vmatpush1.xpose.msra.mxu0 0.0
    %97 = vmatprep.subr.mxu0 0.0
    %98 = vmatpush1.xpose.msra.mxu0 0.0
    %99 = vmatprep.subr.mxu0 0.0
    %100 = vmatpush1.xpose.msra.mxu0 0.0
    %101 = vmatprep.subr.mxu0 0.0
    %102 = vmatpush1.xpose.msra.mxu0 0.0
    %103 = vmatprep.subr.mxu0 0.0
    %104 = vmatpush1.xpose.msra.mxu0 0.0
    %105 = vmatprep.subr.mxu0 0.0
    %106 = vmatpush1.xpose.msra.mxu0 0.0
    %107 = vmatprep.subr.mxu0 0.0
    %108 = vmatpush1.xpose.msra.mxu0 0.0
    %109 = vmatprep.subr.mxu0 0.0
    %110 = vmatpush1.xpose.msra.mxu0 0.0
    %111 = vmatprep.subr.mxu0 0.0
    %112 = vmatpush1.xpose.msra.mxu0 0.0
    %113 = vmatprep.subr.mxu0 0.0
    %114 = vmatpush1.xpose.msra.mxu0 0.0
    %115 = vmatprep.subr.mxu0 0.0
    %116 = vmatpush1.xpose.msra.mxu0 0.0
    %117 = vmatprep.subr.mxu0 0.0
    %118 = vmatpush1.xpose.msra.mxu0 0.0
    %119 = vmatprep.subr.mxu0 0.0
    %120 = vmatpush1.xpose.msra.mxu0 0.0
    %121 = vmatprep.subr.mxu0 0.0
    %122 = vmatpush1.xpose.msra.mxu0 0.0
    %123 = vmatprep.subr.mxu0 0.0
    %124 = vmatpush1.xpose.msra.mxu0 0.0
    %125 = vmatprep.subr.mxu0 0.0
    %126 = vmatpush1.xpose.msra.mxu0 0.0
    %127 = vmatprep.subr.mxu0 0.0
    %128 = vmatpush1.xpose.msra.mxu0 0.0
    %129 = vmatprep.subr.mxu0 0.0
    %130 = vmatpush1.xpose.msra.mxu0 0.0
    %131 = vmatprep.subr.mxu0 0.0
    %132 = vmatpush1.xpose.msra.mxu0 0.0
    %133 = vmatprep.subr.mxu0 0.0
    %134 = vmatpush1.xpose.msra.mxu0 0.0
    %135 = vmatprep.subr.mxu0 0.0
    %136 = vmatpush1.xpose.msra.mxu0 0.0
    %137 = vmatprep.subr.mxu0 0.0
    %138 = vmatpush1.xpose.msra.mxu0 0.0
    %139 = vmatprep.subr.mxu0 0.0
    %140 = vmatpush1.xpose.msra.mxu0 0.0
    %141 = vmatprep.mubr.f32.mxu0 0.0
    %142 = vmatmul.mubr.f32.gmra.mrb[0].mxu0 %v63
    %v143 = vpop.f32.mrb[0].mxu0
    %v144 = vadd.f32 %v44, %v143
    %v145 = vpop.f32.mrb[0].mxu0
    %146 = vmatprep.mubr.f32.mxu0 0.0
    %147 = vmatmul.mubr.f32.gmra.mrb[0].mxu0 %v66
    %v148 = vpop.f32.mrb[0].mxu0
    %v149 = vadd.f32 %v49, %v148
    %v150 = vpop.f32.mrb[0].mxu0
    %151 = vmatprep.mubr.f32.mxu0 0.0
    %152 = vmatmul.mubr.f32.gmra.mrb[0].mxu0 %v69
    %v153 = vpop.f32.mrb[0].mxu0
    %v154 = vadd.f32 %v54, %v153
    %v155 = vpop.f32.mrb[0].mxu0
    %156 = vmatprep.mubr.f32.mxu0 0.0
    %157 = vmatmul.mubr.f32.gmra.mrb[0].mxu0 %v72
    %v158 = vpop.f32.mrb[0].mxu0
    %v159 = vadd.f32 %v59, %v158
    %v160 = vpop.f32.mrb[0].mxu0
    %161 = vdwg.mxu0
    %v162 = vmax.f32 %v144, 0.0
    %v163 = vmax.f32 %v149, 0.0
    %v164 = vmax.f32 %v154, 0.0
    %v165 = vmax.f32 %v159, 0.0
    %v166 = vld [vmem:[%s3] sm:$0xff]
    %v167 = vld [vmem:[%s3 + $0x8] sm:$0x3]
    %v168 = vld [vmem:[%s4] sm:$0xff]
    %v169 = vld [vmem:[%s4 + $0x8] sm:$0x3]
    %171 = vset.pattern.permute.xlu0 0
    %172 = vperm.xlu0 %171, %v168
    %v173 = vpop.permute.xlu0 %172
    %176 = vset.pattern.permute.xlu0 0
    %177 = vperm.xlu0 %176, %v169
    %v178 = vpop.permute.xlu0 %177
    %v181 = vsel %vm61, %v166, 0
    %v184 = vsel %vm61, %v167, 0
    %186 = vmatprep.subr.mxu0 0.0
    %187 = vmatpush1.msra.mxu0 %v162
    %188 = vmatprep.subr.mxu0 0.0
    %189 = vmatpush1.msra.mxu0 %v163
    %190 = vmatprep.subr.mxu0 0.0
    %191 = vmatpush1.msra.mxu0 %v164
    %192 = vmatprep.subr.mxu0 0.0
    %193 = vmatpush1.msra.mxu0 %v165
    %194 = vmatprep.subr.mxu0 0.0
    %195 = vmatpush1.msra.mxu0 0.0
    %196 = vmatprep.subr.mxu0 0.0
    %197 = vmatpush1.msra.mxu0 0.0
    %198 = vmatprep.subr.mxu0 0.0
    %199 = vmatpush1.msra.mxu0 0.0
    %200 = vmatprep.subr.mxu0 0.0
    %201 = vmatpush1.msra.mxu0 0.0
    %202 = vmatprep.subr.mxu0 0.0
    %203 = vmatpush1.msra.mxu0 0.0
    %204 = vmatprep.subr.mxu0 0.0
    %205 = vmatpush1.msra.mxu0 0.0
    %206 = vmatprep.subr.mxu0 0.0
    %207 = vmatpush1.msra.mxu0 0.0
    %208 = vmatprep.subr.mxu0 0.0
    %209 = vmatpush1.msra.mxu0 0.0
    %210 = vmatprep.subr.mxu0 0.0
    %211 = vmatpush1.msra.mxu0 0.0
    %212 = vmatprep.subr.mxu0 0.0
    %213 = vmatpush1.msra.mxu0 0.0
    %214 = vmatprep.subr.mxu0 0.0
    %215 = vmatpush1.msra.mxu0 0.0
    %216 = vmatprep.subr.mxu0 0.0
    %217 = vmatpush1.msra.mxu0 0.0
    %218 = vmatprep.subr.mxu0 0.0
    %219 = vmatpush1.msra.mxu0 0.0
    %220 = vmatprep.subr.mxu0 0.0
    %221 = vmatpush1.msra.mxu0 0.0
    %222 = vmatprep.subr.mxu0 0.0
    %223 = vmatpush1.msra.mxu0 0.0
    %224 = vmatprep.subr.mxu0 0.0
    %225 = vmatpush1.msra.mxu0 0.0
    %226 = vmatprep.subr.mxu0 0.0
    %227 = vmatpush1.msra.mxu0 0.0
    %228 = vmatprep.subr.mxu0 0.0
    %229 = vmatpush1.msra.mxu0 0.0
    %230 = vmatprep.subr.mxu0 0.0
    %231 = vmatpush1.msra.mxu0 0.0
    %232 = vmatprep.subr.mxu0 0.0
    %233 = vmatpush1.msra.mxu0 0.0
    %234 = vmatprep.subr.mxu0 0.0
    %235 = vmatpush1.msra.mxu0 0.0
    %236 = vmatprep.subr.mxu0 0.0
    %237 = vmatpush1.msra.mxu0 0.0
    %238 = vmatprep.subr.mxu0 0.0
    %239 = vmatpush1.msra.mxu0 0.0
    %240 = vmatprep.subr.mxu0 0.0
    %241 = vmatpush1.msra.mxu0 0.0
    %242 = vmatprep.subr.mxu0 0.0
    %243 = vmatpush1.msra.mxu0 0.0
    %244 = vmatprep.subr.mxu0 0.0
    %245 = vmatpush1.msra.mxu0 0.0
    %246 = vmatprep.subr.mxu0 0.0
    %247 = vmatpush1.msra.mxu0 0.0
    %248 = vmatprep.subr.mxu0 0.0
    %249 = vmatpush1.msra.mxu0 0.0
    %250 = vmatprep.mubr.f32.mxu0 0.0
    %251 = vmatmul.mubr.f32.gmra.mrb[0].mxu0 %v181
    %v252 = vpop.f32.mrb[0].mxu0
    %v253 = vadd.f32 %v173, %v252
    %v254 = vpop.f32.mrb[0].mxu0
    %255 = vmatprep.mubr.f32.mxu0 0.0
    %256 = vmatmul.mubr.f32.gmra.mrb[0].mxu0 %v184
    %v257 = vpop.f32.mrb[0].mxu0
    %v258 = vadd.f32 %v178, %v257
    %v259 = vpop.f32.mrb[0].mxu0
    %260 = vdwg.mxu0
    %vm261 = vcmask 64512
    %v262 = vsel %vm261, %v253, -inf
    %vm263 = vcmask 58368
    %v264 = vsel %vm263, %v258, -inf
    %v265 = vmax.f32 %v262, %v264
    %v266 = vrot.slane %v265, 4
    %v267 = vmax.f32 %v265, %v266
    %v268 = vrot.slane %v267, 2
    %v269 = vmax.f32 %v267, %v268
    %v270 = vrot.slane %v269, 1
    %v271 = vmax.f32 %v269, %v270
    %v272 = vsub.f32 %v253, %v271
    %v273 = vsub.f32 %v258, %v271
    %v274 = vmul.f32 %v272, 1.442695
    %v275 = vpow.pop %v274
    %v276 = vmul.f32 %v273, 1.442695
    %v277 = vpow.pop %v276
    %v278 = vsel %vm261, %v275, 0.0
    %v279 = vsel %vm263, %v277, 0.0
    %v280 = vadd.f32 %v278, %v279
    %v281 = vrot.slane %v280, 4
    %v282 = vadd.f32 %v280, %v281
    %v283 = vrot.slane %v282, 2
    %v284 = vadd.f32 %v282, %v283
    %v285 = vrot.slane %v284, 1
    %v286 = vadd.f32 %v284, %v285
    %v287 = vlog2.pop %v286
    %v288 = vmul.f32 %v287, 0.6931472
    %v289 = vsub.f32 %v272, %v288
    %v290 = vsub.f32 %v273, %v288
    %v291 = vlaneseq
    %v292 = vshrl.u32 %v291, 7
    %v293 = vadd.s32 %v292, 8
    %vm294 = vcmp.eq.f32.partialorder %v253, %v271
    %vm295 = vcmp.eq.f32.partialorder %v258, %v271
    %v296 = vsel %vm294, %v292, 10
    %v297 = vsel %vm295, %v293, 10
    %v298 = vsel %vm261, %v296, 2147483647
    %v299 = vsel %vm263, %v297, 2147483647
    %vm300 = vcmp.lt.s32.totalorder %v298, %v299
    %v301 = vsel %vm300, %v298, %v299
    %v302 = vrot.slane %v301, 4
    %vm303 = vcmp.lt.s32.totalorder %v301, %v302
    %v304 = vsel %vm303, %v301, %v302
    %v305 = vrot.slane %v304, 2
    %vm306 = vcmp.lt.s32.totalorder %v304, %v305
    %v307 = vsel %vm306, %v304, %v305
    %v308 = vrot.slane %v307, 1
    %vm309 = vcmp.lt.s32.totalorder %v307, %v308
    %v310 = vsel %vm309, %v307, %v308
    %v311 = vsub.f32 0.0, %v288
    %vm312 = vcmp.lt.s32.totalorder %v292, 8
    %vm313 = vcmp.lt.s32.totalorder %v293, 8
    %vm314 = vcmp.eq.s32.totalorder %v292, 8
    %vm315 = vcmp.eq.s32.totalorder %v293, 8
    %v316 = vcvt.s32.f32 %v310
    %v317 = vsel %vm314, %v316, %v311
    %v318 = vsel %vm315, %v316, %v311
    %v319 = vsel %vm312, %v289, %v317
    %v320 = vsel %vm313, %v290, %v318
    %321 = vst.msk [vmem:[%s5] sm:$0xff] %vm261, %v319
    %322 = vst.msk [vmem:[%s5 + $0x8] sm:$0x3] %vm263, %v320
    // Predicated region
    $region26: #{tpu_custom_call.1} parent=1 // pred_check
      _
    $region27: #{tpu_custom_call.1} parent=1 // pred_check_branch
      %324 = sbr.rel (0) target = $region29
    $region28: #{tpu_custom_call.1} parent=1 // pred_region
      _
    $region29: #{tpu_custom_call.1} parent=1 // pred_fallthru
      _
    // Predicated region
    $region30: #{tpu_custom_call.1} parent=1 // pred_check
      _
    $region31: #{tpu_custom_call.1} parent=1 // pred_check_branch
      %326 = sbr.rel (0) target = $region33
    $region32: #{tpu_custom_call.1} parent=1 // pred_region
      _
    $region33: #{tpu_custom_call.1} parent=1 // pred_fallthru
      _
    %327 = vsyncpa [#allocation3], 1

</llo_original>
